<compile_context>
chip_gen: v5e
topology: v5e:2x2
jax: 0.10.0
libtpu: 0.0.40
codegen_flags: <defaults>
</compile_context>

<pallas_src>
import numpy as np
import jax
import jax.numpy as jnp
from jax.experimental import pallas as pl
from jax.experimental.pallas import tpu as pltpu

LANE = 128
MAX_ROW_TILE = 4096      # 2 MiB per input block; safe double-buffered on all gens
EPS = 1e-07


def _round_up(x, m):
    return (x + m - 1) // m * m


def _num_tensorcores():
    """How many TensorCores a 'parallel' leading grid axis can shard across."""
    try:
        info = pltpu.get_tpu_info()
        for attr in ("num_cores", "num_tensorcores", "core_count"):
            n = getattr(info, attr, None)
            if n:
                return int(n)
    except Exception:
        pass
    try:
        kind = jax.devices()[0].device_kind.lower()
    except Exception:
        return 1
    # v4 / v5p megacore and v7x expose 2 TensorCores per device; v5e/v6e have 1.
    if ("v4" in kind) or ("v5p" in kind) or ("v7" in kind):
        return 2
    return 1


def _vmem_plan():
    """Pick (max_row_tile, vmem_limit_bytes) from actual VMEM capacity."""
    try:
        cap = int(pltpu.get_tpu_info().vmem_capacity_bytes)
        if cap < (16 << 20):
            cap = 64 << 20
    except Exception:
        cap = 64 << 20  # conservative: v7x per-TC physical VMEM
    # Double-buffered input footprint: 2 inputs x 2 buffers x row_tile x 128 x 4B
    # = 2048 B per row.  Keep it <= ~1/8 of physical VMEM (and <= 8 MiB) so
    # pipeline buffers + elementwise intermediates fit comfortably.
    input_budget = min(cap // 8, 8 << 20)
    max_rows = max(8, (input_budget // (2 * 2 * LANE * 4)) // 8 * 8)
    row_tile_cap = min(MAX_ROW_TILE, max_rows)
    vmem_limit = min(cap // 2, 48 << 20)   # also fixes v5e's 16 MiB scoped default
    return row_tile_cap, vmem_limit


def _make_dice_partial_kernel(row_tile, rows, tiles_per_core):
    chunks = row_tile // 8

    def kernel(p_ref, m_ref, out_ref, num_acc, den_acc):
        c = pl.program_id(0)
        i = pl.program_id(1)

        @pl.when(i == 0)
        def _():
            num_acc[...] = jnp.zeros_like(num_acc)
            den_acc[...] = jnp.zeros_like(den_acc)

        p = p_ref[...].astype(jnp.float32)
        m = m_ref[...].astype(jnp.float32)

        # Logical (unclamped) tile handled by this step.
        tile_idx = c * tiles_per_core + i
        is_full = (tile_idx + 1) * row_tile <= rows

        # Fast path: interior tiles are always fully valid -> just 2 muls and
        # the vreg-resident (8, LANE) accumulation (pure VPU work).
        @pl.when(is_full)
        def _():
            num_acc[...] += jnp.sum((p * m).reshape(chunks, 8, LANE), axis=0)
            den_acc[...] += jnp.sum((m * m).reshape(chunks, 8, LANE), axis=0)

        # Slow path: only the partial last tile and any clamped-duplicate tile
        # (when the core split does not divide the tile count) pay for the
        # iota + compare + select masking. Selects zero out-of-range rows so
        # garbage in the partial block never reaches the accumulators.
        @pl.when(jnp.logical_not(is_full))
        def _():
            row_ids = (tile_idx * row_tile
                       + jax.lax.broadcasted_iota(jnp.int32, (row_tile, LANE), 0))
            valid = row_ids < rows
            pm = jnp.where(valid, p * m, 0.0)
            mm = jnp.where(valid, m * m, 0.0)
            num_acc[...] += jnp.sum(pm.reshape(chunks, 8, LANE), axis=0)
            den_acc[...] += jnp.sum(mm.reshape(chunks, 8, LANE), axis=0)

        @pl.when(i == tiles_per_core - 1)
        def _():
            # Sublane reduce in-kernel (XLU slot is otherwise idle): the XLA
            # epilogue only has to reduce (splits, 2, 1, 128).
            out_ref[0, 0, :, :] = jnp.sum(num_acc[...], axis=0, keepdims=True)
            out_ref[0, 1, :, :] = jnp.sum(den_acc[...], axis=0, keepdims=True)

    return kernel


def dice_loss_multiclass(output, mask):
    """Pallas TPU implementation of DICELossMultiClass.forward."""
    total = int(np.prod(output.shape))
    flat_p = jnp.reshape(output, (-1,))
    flat_m = jnp.reshape(mask, (-1,))

    rows = total // LANE
    tail = total - rows * LANE

    if rows < 8:
        # TODO(synk): inputs under ~1K elements skip the Pallas path entirely
        # (a kernel launch is not worth it and rows<8 breaks (8,128) tiling).
        p32 = flat_p.astype(jnp.float32)
        m32 = flat_m.astype(jnp.float32)
        num1 = jnp.sum(p32 * m32)
        den2 = jnp.sum(m32 * m32)
        dice = 2.0 * (num1 + EPS) / (num1 + den2 + EPS)
        return 1.0 - dice

    # Lane-dense (rows, 128) view of the 128-aligned prefix (no jnp.pad copy).
    p2 = jnp.reshape(flat_p[: rows * LANE], (rows, LANE))
    m2 = jnp.reshape(flat_m[: rows * LANE], (rows, LANE))

    row_tile_cap, vmem_limit = _vmem_plan()
    row_tile = min(row_tile_cap, _round_up(rows, 8))
    total_tiles = pl.cdiv(rows, row_tile)
    num_splits = _num_tensorcores() if total_tiles > 1 else 1
    tiles_per_core = pl.cdiv(total_tiles, num_splits)
    grid = (num_splits, tiles_per_core)

    def in_map(c, i):
        # Clamp so the DMA window never starts past the last valid tile;
        # logically out-of-range tiles are zero-masked inside the kernel.
        return (jnp.minimum(c * tiles_per_core + i, total_tiles - 1), 0)

    kernel = _make_dice_partial_kernel(row_tile, rows, tiles_per_core)

    in_bytes = p2.size * p2.dtype.itemsize + m2.size * m2.dtype.itemsize
    out_bytes = num_splits * 2 * 1 * LANE * 4
    cost = pl.CostEstimate(flops=int(4 * rows * LANE),
                           transcendentals=0,
                           bytes_accessed=int(in_bytes + out_bytes))

    # TODO(synk): on v7x, verify the leading "parallel" axis actually shards
    # across both TensorCores; if not, switch it to pltpu.CORE_PARALLEL.
    parts = pl.pallas_call(
        kernel,
        out_shape=jax.ShapeDtypeStruct((num_splits, 2, 1, LANE), jnp.float32),
        grid_spec=pltpu.PrefetchScalarGridSpec(
            num_scalar_prefetch=0,
            grid=grid,
            in_specs=[
                pl.BlockSpec((row_tile, LANE), in_map),
                pl.BlockSpec((row_tile, LANE), in_map),
            ],
            out_specs=pl.BlockSpec((1, 2, 1, LANE), lambda c, i: (c, 0, 0, 0)),
            scratch_shapes=[
                pltpu.VMEM((8, LANE), jnp.float32),
                pltpu.VMEM((8, LANE), jnp.float32),
            ],
        ),
        compiler_params=pltpu.CompilerParams(
            dimension_semantics=("parallel", "arbitrary"),
            vmem_limit_bytes=int(vmem_limit),
        ),
        cost_estimate=cost,
    )(p2, m2)

    # Tiny epilogue: one reduce over (splits, 2, 1, 128) partials.
    totals = jnp.sum(parts, axis=(0, 2, 3))
    num1 = totals[0]
    den2 = totals[1]

    if tail:
        # Sub-128 tail handled directly (O(128) work, avoids padded HBM copies).
        tp = flat_p[rows * LANE:].astype(jnp.float32)
        tm_ = flat_m[rows * LANE:].astype(jnp.float32)
        num1 = num1 + jnp.sum(tp * tm_)
        den2 = den2 + jnp.sum(tm_ * tm_)

    den1 = num1                    # identical reduction in the reference module
    dice = 2.0 * (num1 + EPS) / (den1 + den2 + EPS)
    return 1.0 - dice              # dice.size(0) == 1 in the reference


def _reference(output, mask):
    probs = output.astype(jnp.float32)
    mask = mask.astype(jnp.float32)
    num1 = jnp.sum(probs * mask)
    den1 = num1
    den2 = jnp.sum(mask * mask)
    dice = 2.0 * (num1 + EPS) / (den1 + den2 + EPS)
    return 1.0 - dice


if __name__ == "__main__":
    key = jax.random.PRNGKey(0)
    k1, k2 = jax.random.split(key)

    # NCHW, small shapes consistent with a segmentation output/mask pair.
    shape = (2, 4, 16, 16)
    output = jax.nn.sigmoid(jax.random.normal(k1, shape, dtype=jnp.float32))
    mask = (jax.random.uniform(k2, shape) > 0.5).astype(jnp.float32)

    loss = dice_loss_multiclass(output, mask)
    jax.block_until_ready(loss)

    ref = _reference(output, mask)
    np.testing.assert_allclose(np.asarray(loss), np.asarray(ref),
                               rtol=1e-5, atol=1e-6)
    print("KERNEL_OK")
</pallas_src>

<mosaic_0001>
module attributes {stable_mosaic.version = 11 : i64} {
  func.func @kernel(%arg0: i32, %arg1: i32, %arg2: memref<16x128xf32, #tpu.memory_space<vmem>>, %arg3: memref<16x128xf32, #tpu.memory_space<vmem>>, %arg4: memref<1x2x1x128xf32, #tpu.memory_space<vmem>>, %arg5: memref<8x128xf32, #tpu.memory_space<vmem>>, %arg6: memref<8x128xf32, #tpu.memory_space<vmem>>) attributes {dimension_semantics = [#tpu.dimension_semantics<parallel>, #tpu.dimension_semantics<arbitrary>], iteration_bounds = array<i64: 1, 1>, scalar_prefetch = 0 : i64, scratch_operands = 2 : i64, tpu.core_type = #tpu.core_type<tc>, window_params = [{transform_indices = @transform_0, window_bounds = array<i64: 16, 128>}, {transform_indices = @transform_1, window_bounds = array<i64: 16, 128>}, {transform_indices = @transform_2, window_bounds = array<i64: 1, 2, 1, 128>}]} {
    %c0_i32 = arith.constant 0 : i32
    %0 = arith.cmpi eq, %arg1, %c0_i32 : i32
    %1 = arith.extui %0 : i1 to i32
    %c0_i32_0 = arith.constant 0 : i32
    %2 = arith.cmpi ne, %1, %c0_i32_0 : i32
    scf.if %2 {
      %cst = arith.constant 0.000000e+00 : f32
      %18 = vector.broadcast %cst : f32 to vector<8x128xf32>
      %c0_10 = arith.constant 0 : index
      %c0_11 = arith.constant 0 : index
      %19 = vector.load %arg5[%c0_10, %c0_11] : memref<8x128xf32, #tpu.memory_space<vmem>>, vector<8x128xf32>
      tpu.vector_store %arg5[%c0_10, %c0_11], %18 {strides = array<i32>} : memref<8x128xf32, #tpu.memory_space<vmem>>, vector<8x128xf32>,
      %cst_12 = arith.constant 0.000000e+00 : f32
      %20 = vector.broadcast %cst_12 : f32 to vector<8x128xf32>
      %c0_13 = arith.constant 0 : index
      %c0_14 = arith.constant 0 : index
      %21 = vector.load %arg6[%c0_13, %c0_14] : memref<8x128xf32, #tpu.memory_space<vmem>>, vector<8x128xf32>
      tpu.vector_store %arg6[%c0_13, %c0_14], %20 {strides = array<i32>} : memref<8x128xf32, #tpu.memory_space<vmem>>, vector<8x128xf32>,
    } else {
    }
    %c0 = arith.constant 0 : index
    %c0_1 = arith.constant 0 : index
    %3 = vector.load %arg2[%c0, %c0_1] : memref<16x128xf32, #tpu.memory_space<vmem>>, vector<16x128xf32>
    %c0_2 = arith.constant 0 : index
    %c0_3 = arith.constant 0 : index
    %4 = vector.load %arg3[%c0_2, %c0_3] : memref<16x128xf32, #tpu.memory_space<vmem>>, vector<16x128xf32>
    %c1_i32 = arith.constant 1 : i32
    %5 = arith.muli %arg0, %c1_i32 : i32
    %6 = arith.addi %5, %arg1 : i32
    %c1_i32_4 = arith.constant 1 : i32
    %7 = arith.addi %6, %c1_i32_4 : i32
    %c16_i32 = arith.constant 16 : i32
    %8 = arith.muli %7, %c16_i32 : i32
    %c16_i32_5 = arith.constant 16 : i32
    %9 = arith.cmpi sle, %8, %c16_i32_5 : i32
    %10 = arith.extui %9 : i1 to i32
    %c0_i32_6 = arith.constant 0 : i32
    %11 = arith.cmpi ne, %10, %c0_i32_6 : i32
    scf.if %11 {
      %c0_10 = arith.constant 0 : index
      %c0_11 = arith.constant 0 : index
      %18 = vector.load %arg5[%c0_10, %c0_11] : memref<8x128xf32, #tpu.memory_space<vmem>>, vector<8x128xf32>
      %19 = arith.mulf %3, %4 : vector<16x128xf32>
      %20 = vector.shape_cast %19 : vector<16x128xf32> to vector<2x8x128xf32>
      %cst = arith.constant dense<0.000000e+00> : vector<8x128xf32>
      %21 = vector.multi_reduction <add>, %20, %cst [0] : vector<2x8x128xf32> to vector<8x128xf32>
      %22 = arith.addf %18, %21 : vector<8x128xf32>
      %c0_12 = arith.constant 0 : index
      %c0_13 = arith.constant 0 : index
      %23 = vector.load %arg5[%c0_12, %c0_13] : memref<8x128xf32, #tpu.memory_space<vmem>>, vector<8x128xf32>
      tpu.vector_store %arg5[%c0_12, %c0_13], %22 {strides = array<i32>} : memref<8x128xf32, #tpu.memory_space<vmem>>, vector<8x128xf32>,
      %c0_14 = arith.constant 0 : index
      %c0_15 = arith.constant 0 : index
      %24 = vector.load %arg6[%c0_14, %c0_15] : memref<8x128xf32, #tpu.memory_space<vmem>>, vector<8x128xf32>
      %25 = arith.mulf %4, %4 : vector<16x128xf32>
      %26 = vector.shape_cast %25 : vector<16x128xf32> to vector<2x8x128xf32>
      %cst_16 = arith.constant dense<0.000000e+00> : vector<8x128xf32>
      %27 = vector.multi_reduction <add>, %26, %cst_16 [0] : vector<2x8x128xf32> to vector<8x128xf32>
      %28 = arith.addf %24, %27 : vector<8x128xf32>
      %c0_17 = arith.constant 0 : index
      %c0_18 = arith.constant 0 : index
      %29 = vector.load %arg6[%c0_17, %c0_18] : memref<8x128xf32, #tpu.memory_space<vmem>>, vector<8x128xf32>
      tpu.vector_store %arg6[%c0_17, %c0_18], %28 {strides = array<i32>} : memref<8x128xf32, #tpu.memory_space<vmem>>, vector<8x128xf32>,
    } else {
    }
    %true = arith.constant true
    %12 = arith.xori %9, %true : i1
    %13 = arith.extui %12 : i1 to i32
    %c0_i32_7 = arith.constant 0 : i32
    %14 = arith.cmpi ne, %13, %c0_i32_7 : i32
    scf.if %14 {
      %c16_i32_10 = arith.constant 16 : i32
      %18 = arith.muli %6, %c16_i32_10 : i32
      %19 = tpu.iota {dimensions = array<i32: 0>} : vector<16x128xi32>
      %20 = vector.broadcast %18 : i32 to vector<16x128xi32>
      %21 = arith.addi %20, %19 : vector<16x128xi32>
      %c16_i32_11 = arith.constant 16 : i32
      %22 = vector.broadcast %c16_i32_11 : i32 to vector<16x128xi32>
      %23 = arith.cmpi slt, %21, %22 : vector<16x128xi32>
      %24 = arith.mulf %3, %4 : vector<16x128xf32>
      %cst = arith.constant 0.000000e+00 : f32
      %25 = vector.broadcast %cst : f32 to vector<16x128xf32>
      %26 = arith.select %23, %24, %25 : vector<16x128xi1>, vector<16x128xf32>
      %27 = arith.mulf %4, %4 : vector<16x128xf32>
      %cst_12 = arith.constant 0.000000e+00 : f32
      %28 = vector.broadcast %cst_12 : f32 to vector<16x128xf32>
      %29 = arith.select %23, %27, %28 : vector<16x128xi1>, vector<16x128xf32>
      %c0_13 = arith.constant 0 : index
      %c0_14 = arith.constant 0 : index
      %30 = vector.load %arg5[%c0_13, %c0_14] : memref<8x128xf32, #tpu.memory_space<vmem>>, vector<8x128xf32>
      %31 = vector.shape_cast %26 : vector<16x128xf32> to vector<2x8x128xf32>
      %cst_15 = arith.constant dense<0.000000e+00> : vector<8x128xf32>
      %32 = vector.multi_reduction <add>, %31, %cst_15 [0] : vector<2x8x128xf32> to vector<8x128xf32>
      %33 = arith.addf %30, %32 : vector<8x128xf32>
      %c0_16 = arith.constant 0 : index
      %c0_17 = arith.constant 0 : index
      %34 = vector.load %arg5[%c0_16, %c0_17] : memref<8x128xf32, #tpu.memory_space<vmem>>, vector<8x128xf32>
      tpu.vector_store %arg5[%c0_16, %c0_17], %33 {strides = array<i32>} : memref<8x128xf32, #tpu.memory_space<vmem>>, vector<8x128xf32>,
      %c0_18 = arith.constant 0 : index
      %c0_19 = arith.constant 0 : index
      %35 = vector.load %arg6[%c0_18, %c0_19] : memref<8x128xf32, #tpu.memory_space<vmem>>, vector<8x128xf32>
      %36 = vector.shape_cast %29 : vector<16x128xf32> to vector<2x8x128xf32>
      %cst_20 = arith.constant dense<0.000000e+00> : vector<8x128xf32>
      %37 = vector.multi_reduction <add>, %36, %cst_20 [0] : vector<2x8x128xf32> to vector<8x128xf32>
      %38 = arith.addf %35, %37 : vector<8x128xf32>
      %c0_21 = arith.constant 0 : index
      %c0_22 = arith.constant 0 : index
      %39 = vector.load %arg6[%c0_21, %c0_22] : memref<8x128xf32, #tpu.memory_space<vmem>>, vector<8x128xf32>
      tpu.vector_store %arg6[%c0_21, %c0_22], %38 {strides = array<i32>} : memref<8x128xf32, #tpu.memory_space<vmem>>, vector<8x128xf32>,
    } else {
    }
    %c0_i32_8 = arith.constant 0 : i32
    %15 = arith.cmpi eq, %arg1, %c0_i32_8 : i32
    %16 = arith.extui %15 : i1 to i32
    %c0_i32_9 = arith.constant 0 : i32
    %17 = arith.cmpi ne, %16, %c0_i32_9 : i32
    scf.if %17 {
      %c0_10 = arith.constant 0 : index
      %c0_11 = arith.constant 0 : index
      %18 = vector.load %arg5[%c0_10, %c0_11] : memref<8x128xf32, #tpu.memory_space<vmem>>, vector<8x128xf32>
      %cst = arith.constant dense<0.000000e+00> : vector<128xf32>
      %19 = vector.multi_reduction <add>, %18, %cst [0] : vector<8x128xf32> to vector<128xf32>
      %20 = vector.shape_cast %19 : vector<128xf32> to vector<1x128xf32>
      %c0_12 = arith.constant 0 : index
      %c0_13 = arith.constant 0 : index
      %c0_14 = arith.constant 0 : index
      %c0_15 = arith.constant 0 : index
      %21 = vector.load %arg4[%c0_12, %c0_13, %c0_14, %c0_15] : memref<1x2x1x128xf32, #tpu.memory_space<vmem>>, vector<1x1x1x128xf32>
      %22 = vector.shape_cast %21 : vector<1x1x1x128xf32> to vector<1x128xf32>
      %23 = vector.shape_cast %20 : vector<1x128xf32> to vector<1x1x1x128xf32>
      tpu.vector_store %arg4[%c0_12, %c0_13, %c0_14, %c0_15], %23 {strides = array<i32>} : memref<1x2x1x128xf32, #tpu.memory_space<vmem>>, vector<1x1x1x128xf32>,
      %c0_16 = arith.constant 0 : index
      %c0_17 = arith.constant 0 : index
      %24 = vector.load %arg6[%c0_16, %c0_17] : memref<8x128xf32, #tpu.memory_space<vmem>>, vector<8x128xf32>
      %cst_18 = arith.constant dense<0.000000e+00> : vector<128xf32>
      %25 = vector.multi_reduction <add>, %24, %cst_18 [0] : vector<8x128xf32> to vector<128xf32>
      %26 = vector.shape_cast %25 : vector<128xf32> to vector<1x128xf32>
      %c0_19 = arith.constant 0 : index
      %c1 = arith.constant 1 : index
      %c0_20 = arith.constant 0 : index
      %c0_21 = arith.constant 0 : index
      %27 = vector.load %arg4[%c0_19, %c1, %c0_20, %c0_21] : memref<1x2x1x128xf32, #tpu.memory_space<vmem>>, vector<1x1x1x128xf32>
      %28 = vector.shape_cast %27 : vector<1x1x1x128xf32> to vector<1x128xf32>
      %29 = vector.shape_cast %26 : vector<1x128xf32> to vector<1x1x1x128xf32>
      tpu.vector_store %arg4[%c0_19, %c1, %c0_20, %c0_21], %29 {strides = array<i32>} : memref<1x2x1x128xf32, #tpu.memory_space<vmem>>, vector<1x1x1x128xf32>,
    } else {
    }
    return
  }
  func.func @transform_0(%arg0: i32, %arg1: i32) -> (i32, i32) {
    %c1_i32 = arith.constant 1 : i32
    %0 = arith.muli %arg0, %c1_i32 : i32
    %1 = arith.addi %0, %arg1 : i32
    %c0_i32 = arith.constant 0 : i32
    %2 = arith.minsi %1, %c0_i32 : i32
    %c0_i32_0 = arith.constant 0 : i32
    %c0_i32_1 = arith.constant 0 : i32
    return %2, %c0_i32_0 : i32, i32
  }
  func.func @transform_1(%arg0: i32, %arg1: i32) -> (i32, i32) {
    %c1_i32 = arith.constant 1 : i32
    %0 = arith.muli %arg0, %c1_i32 : i32
    %1 = arith.addi %0, %arg1 : i32
    %c0_i32 = arith.constant 0 : i32
    %2 = arith.minsi %1, %c0_i32 : i32
    %c0_i32_0 = arith.constant 0 : i32
    %c0_i32_1 = arith.constant 0 : i32
    return %2, %c0_i32_0 : i32, i32
  }
  func.func @transform_2(%arg0: i32, %arg1: i32) -> (i32, i32, i32, i32) {
    %c0_i32 = arith.constant 0 : i32
    %c0_i32_0 = arith.constant 0 : i32
    %c0_i32_1 = arith.constant 0 : i32
    %c0_i32_2 = arith.constant 0 : i32
    return %arg0, %c0_i32, %c0_i32_0, %c0_i32_1 : i32, i32, i32, i32
  }
}

</mosaic_0001>

<llo_original>
// kernel: tpu_custom_call.1
$region0: #{tpu_custom_call.1}
  #allocation0 [shape = 'u32[]', space=smem, size = 0x4, offset = 0x4, fixed_abs, tag = 'smem constant byte address 0x4 - core index']
  #allocation1 [shape = 'u32[72,128]{1,0:T(1,128)}', space=vmem, size = 0x9000, scoped, tag = 'internal scratch']
  #allocation2 [shape = 'f32[8,128]{1,0:T(8,128)}', space=vmem, size = 0x1000, scoped, tag = 'scratch operand']
  #allocation3 [shape = 'f32[8,128]{1,0:T(8,128)}', space=vmem, size = 0x1000, scoped, tag = 'scratch operand']
  %s0 = inlined_call_operand.hbm [shape: f32[16,128], index: 0, kind: input, shape index: {}]
  %s1 = inlined_call_operand.hbm [shape: f32[16,128], index: 1, kind: input, shape index: {}]
  %s2 = inlined_call_operand.hbm [shape: f32[1,2,1,128], index: 2, kind: output, shape index: {}]
  %s3 = sld [smem:[#allocation0]]
  $region42: #{tpu_custom_call.1} parent=0
    _
  %s5 = ssub.s32 1, %s3
  %s6 = scalar_select 0, %s5, %s3
  $region1: #{tpu_custom_call.1} parent=0
    #allocation4 [shape = 'u8[8192]{0}', space=vmem, size = 0x2000, scoped, tag = 'input window, operand 0, single buffered']
    #allocation5 [shape = 's32[1]{0}', space=sflag, size = 0x4, scoped, tag = 'scoped memory for tpu_custom_call.1']
    #allocation6 [shape = 's32[1]{0}', space=sflag, size = 0x4, scoped, tag = 'scoped memory for tpu_custom_call.1']
    #allocation7 [shape = 'u8[8192]{0}', space=vmem, size = 0x2000, scoped, tag = 'input window, operand 1, single buffered']
    #allocation8 [shape = 's32[1]{0}', space=sflag, size = 0x4, scoped, tag = 'scoped memory for tpu_custom_call.1']
    #allocation9 [shape = 'u8[1024]{0}', space=vmem, size = 0x400, scoped, tag = 'output window, operand 0, single buffered']
    %7 = vsyncpa [#allocation5], 0
    %8 = vsyncpa [#allocation8], 0
    %9 = vsyncpa [#allocation6], 0
    // Predicated region
    $region2: #{tpu_custom_call.1} parent=1 // pred_check
      _
    $region3: #{tpu_custom_call.1} parent=1 // pred_check_branch
      %11 = sbr.rel (0) target = $region5
    $region4: #{tpu_custom_call.1} parent=1 // pred_region
      %s12 = sadd.s32 0, 0
      %p13 = scmp.lt.s32.totalorder %s12, 0
      %s14 = scalar_select %p13, %s12, 0
      %s15 = smul.u32 2, %s14
      %17 = vsyncadd [#allocation5], 0
      %s18 = smul.addr %s15, 8
      %s19 = scalar_lea.hbm %s0, %s18
      %s20 = sshll.u32 %s19, 4
      %s21 = int_to_ptr.hbm [resolvable:$true] %s20
      %s22 = sshll.u32 [#allocation4], 4
      %s23 = int_to_ptr.vmem [resolvable:$true] %s22
      %28 = dma.hbm_to_vmem [thread:$0]  %s21, 256, %s23, [#allocation5], 128, 128, 8
    $region5: #{tpu_custom_call.1} parent=1 // pred_fallthru
      _
    // Predicated region
    $region6: #{tpu_custom_call.1} parent=1 // pred_check
      _
    $region7: #{tpu_custom_call.1} parent=1 // pred_check_branch
      %30 = sbr.rel (0) target = $region9
    $region8: #{tpu_custom_call.1} parent=1 // pred_region
      %s31 = sadd.s32 0, 0
      %p32 = scmp.lt.s32.totalorder %s31, 0
      %s33 = scalar_select %p32, %s31, 0
      %s34 = smul.u32 2, %s33
      %36 = vsyncadd [#allocation8], 0
      %s37 = smul.addr %s34, 8
      %s38 = scalar_lea.hbm %s1, %s37
      %s39 = sshll.u32 %s38, 4
      %s40 = int_to_ptr.hbm [resolvable:$true] %s39
      %s41 = sshll.u32 [#allocation7], 4
      %s42 = int_to_ptr.vmem [resolvable:$true] %s41
      %47 = dma.hbm_to_vmem [thread:$0]  %s40, 256, %s42, [#allocation8], 128, 128, 8
    $region9: #{tpu_custom_call.1} parent=1 // pred_fallthru
      _
    // Predicated region
    $region10: #{tpu_custom_call.1} parent=1 // pred_check
      _
    $region11: #{tpu_custom_call.1} parent=1 // pred_check_branch
      %49 = sbr.rel (0) target = $region13
    $region12: #{tpu_custom_call.1} parent=1 // pred_region
      %51 = dma.done [#allocation5], 256
    $region13: #{tpu_custom_call.1} parent=1 // pred_fallthru
      _
    // Predicated region
    $region14: #{tpu_custom_call.1} parent=1 // pred_check
      _
    $region15: #{tpu_custom_call.1} parent=1 // pred_check_branch
      %53 = sbr.rel (0) target = $region17
    $region16: #{tpu_custom_call.1} parent=1 // pred_region
      %55 = dma.done [#allocation8], 256
    $region17: #{tpu_custom_call.1} parent=1 // pred_fallthru
      _
    %s56 = sadd.s32 0, 0
    %p57 = scmp.lt.s32.totalorder %s56, 0
    %s58 = scalar_select %p57, %s56, 0
    %s59 = smul.u32 2, %s58
    %s60 = sadd.s32 0, 0
    %p61 = scmp.lt.s32.totalorder %s60, 0
    %s62 = scalar_select %p61, %s60, 0
    %s63 = smul.u32 2, %s62
    %p64 = scmp.eq.s32.totalorder 0, 0
    // Predicated region
    $region18: #{tpu_custom_call.1} parent=1 // pred_check
      %p65 = pneg %p64
    $region19: #{tpu_custom_call.1} parent=1 // pred_check_branch
      %67 = sbr.rel (%p65) target = $region21
    $region20: #{tpu_custom_call.1} parent=1 // pred_region
      %68 = vst [vmem:[#allocation2] sm:$0xff] 0.0
      %69 = vst [vmem:[#allocation3] sm:$0xff] 0.0
    $region21: #{tpu_custom_call.1} parent=1 // pred_fallthru
      _
    %v70 = vld [vmem:[#allocation4] sm:$0xff]
    %v71 = vld [vmem:[#allocation4 + $0x8] sm:$0xff]
    %v72 = vld [vmem:[#allocation7] sm:$0xff]
    %v73 = vld [vmem:[#allocation7 + $0x8] sm:$0xff]
    %s74 = sadd.s32 0, 0
    %s75 = sadd.s32 %s74, 1
    %s76 = smul.u32 %s75, 16
    %p77 = scmp.le.s32.totalorder %s76, 16
    // Predicated region
    $region22: #{tpu_custom_call.1} parent=1 // pred_check
      %p78 = pneg %p77
    $region23: #{tpu_custom_call.1} parent=1 // pred_check_branch
      %80 = sbr.rel (%p78) target = $region25
    $region24: #{tpu_custom_call.1} parent=1 // pred_region
      %v81 = vld [vmem:[#allocation2] sm:$0xff]
      %v82 = vmul.f32 %v70, %v72
      %v83 = vmul.f32 %v71, %v73
      %v84 = vadd.f32 %v82, %v83
      %v85 = vadd.f32 %v81, %v84
      %86 = vst [vmem:[#allocation2] sm:$0xff] %v85
      %v87 = vld [vmem:[#allocation3] sm:$0xff]
      %v88 = vmul.f32 %v72, %v72
      %v89 = vmul.f32 %v73, %v73
      %v90 = vadd.f32 %v88, %v89
      %v91 = vadd.f32 %v87, %v90
      %92 = vst [vmem:[#allocation3] sm:$0xff] %v91
    $region25: #{tpu_custom_call.1} parent=1 // pred_fallthru
      _
    %p93 = scmp.gt.s32.totalorder %s76, 16
    // Predicated region
    $region26: #{tpu_custom_call.1} parent=1 // pred_check
      %p94 = pneg %p93
    $region27: #{tpu_custom_call.1} parent=1 // pred_check_branch
      %96 = sbr.rel (%p94) target = $region29
    $region28: #{tpu_custom_call.1} parent=1 // pred_region
      %s97 = smul.u32 %s74, 16
      %v98 = vlaneseq
      %v99 = vshrl.u32 %v98, 7
      %v100 = vadd.s32 %v99, 8
      %v101 = vstv %s97
      %v102 = vadd.s32 %v101, %v99
      %v103 = vadd.s32 %v101, %v100
      %vm104 = vcmp.lt.s32.totalorder %v102, 16
      %vm105 = vcmp.lt.s32.totalorder %v103, 16
      %v106 = vmul.f32 %v70, %v72
      %v107 = vmul.f32 %v71, %v73
      %v108 = vsel %vm104, %v106, 0.0
      %v109 = vsel %vm105, %v107, 0.0
      %v110 = vmul.f32 %v72, %v72
      %v111 = vmul.f32 %v73, %v73
      %v112 = vsel %vm104, %v110, 0.0
      %v113 = vsel %vm105, %v111, 0.0
      %v114 = vld [vmem:[#allocation2] sm:$0xff]
      %v115 = vadd.f32 %v108, %v109
      %v116 = vadd.f32 %v114, %v115
      %117 = vst [vmem:[#allocation2] sm:$0xff] %v116
      %v118 = vld [vmem:[#allocation3] sm:$0xff]
      %v119 = vadd.f32 %v112, %v113
      %v120 = vadd.f32 %v118, %v119
      %121 = vst [vmem:[#allocation3] sm:$0xff] %v120
    $region29: #{tpu_custom_call.1} parent=1 // pred_fallthru
      _
    // Predicated region
    $region30: #{tpu_custom_call.1} parent=1 // pred_check
      %p122 = pneg %p64
    $region31: #{tpu_custom_call.1} parent=1 // pred_check_branch
      %124 = sbr.rel (%p122) target = $region33
    $region32: #{tpu_custom_call.1} parent=1 // pred_region
      %v125 = vld [vmem:[#allocation2] sm:$0xff]
      %v126 = vrot.slane %v125, 4
      %v127 = vadd.f32 %v125, %v126
      %v128 = vrot.slane %v127, 2
      %v129 = vadd.f32 %v127, %v128
      %v130 = vrot.slane %v129, 1
      %v131 = vadd.f32 %v129, %v130
      %132 = vst [vmem:[#allocation9] sm:$0x1] %v131
      %v133 = vld [vmem:[#allocation3] sm:$0xff]
      %v134 = vrot.slane %v133, 4
      %v135 = vadd.f32 %v133, %v134
      %v136 = vrot.slane %v135, 2
      %v137 = vadd.f32 %v135, %v136
      %v138 = vrot.slane %v137, 1
      %v139 = vadd.f32 %v137, %v138
      %s140 = scalar_lea.vmem [#allocation9], 1
      %141 = vst [vmem:[%s140] sm:$0x1] %v139
    $region33: #{tpu_custom_call.1} parent=1 // pred_fallthru
      _
    // Predicated region
    $region34: #{tpu_custom_call.1} parent=1 // pred_check
      _
    $region35: #{tpu_custom_call.1} parent=1 // pred_check_branch
      %143 = sbr.rel (0) target = $region37
    $region36: #{tpu_custom_call.1} parent=1 // pred_region
      %145 = vsyncadd [#allocation6], 0
      %s146 = sshll.u32 [#allocation9], 4
      %s147 = int_to_ptr.vmem [resolvable:$true] %s146
      %s148 = sshll.u32 %s2, 4
      %s149 = int_to_ptr.hbm [resolvable:$true] %s148
      %154 = dma.vmem_to_hbm [thread:$0]  %s147, 32, %s149, [#allocation6], 16, 16, 1
    $region37: #{tpu_custom_call.1} parent=1 // pred_fallthru
      _
    // Predicated region
    $region38: #{tpu_custom_call.1} parent=1 // pred_check
      _
    $region39: #{tpu_custom_call.1} parent=1 // pred_check_branch
      %156 = sbr.rel (0) target = $region41
    $region40: #{tpu_custom_call.1} parent=1 // pred_region
      %158 = dma.done [#allocation6], 32
    $region41: #{tpu_custom_call.1} parent=1 // pred_fallthru
      _
    %159 = vsyncpa [#allocation5], 1
    %160 = vsyncpa [#allocation8], 1
    %161 = vsyncpa [#allocation6], 1

</llo_original>
